<compile_context>
chip_gen: v7x
topology: tpu7x:2x2x1
jax: 0.10.0
libtpu: 0.0.40
codegen_flags: <defaults>
</compile_context>

<pallas_src>
import functools

import jax
import jax.numpy as jnp
from jax.experimental import pallas as pl
from jax.experimental.pallas import tpu as pltpu

# Abramowitz & Stegun 4.4.46 coefficients for arcsin(x), x in [0, 1],
# |error| <= 2e-8 (well inside f32 precision). Used because jnp.arcsin
# decomposes through atan2, which Mosaic TPU does not lower.
_ASIN_COEFFS = (
    1.5707963050, -0.2145988016, 0.0889789874, -0.0501743046,
    0.0308918810, -0.0170881256, 0.0066700901, -0.0012624911,
)


def _arcsin01(x):
    """arcsin for x already guaranteed to lie in [0, 1] (no extra clip)."""
    p = jnp.float32(_ASIN_COEFFS[-1])
    for c in _ASIN_COEFFS[-2::-1]:        # Horner from a7 down to a0
        p = p * x + jnp.float32(c)
    return jnp.float32(jnp.pi / 2) - jnp.sqrt(1.0 - x) * p


def _prompt_kernel(x_ref, en_ref, o_ref, *, n_rows, tm):
    """One N-tile: normalize rows, Gram matmul vs normalized embed, arcsin^2,
    accumulate the tile's unsigned distance sum into the (1,1) output."""
    i = pl.program_id(0)

    @pl.when(i == 0)
    def _():
        o_ref[...] = jnp.zeros_like(o_ref)

    x = x_ref[...].astype(jnp.float32)                      # (tm, D)

    # F.normalize(..., dim=feature): v / max(||v||, 1e-12)  (rsqrt -> EUP slot)
    sq = jnp.sum(x * x, axis=1, keepdims=True)
    xn = x * jax.lax.rsqrt(jnp.maximum(sq, jnp.float32(1e-24)))

    # Gram matmul on the MXU: s[n, m] = xn[n] . en[m]   (en pre-normalized).
    s = jax.lax.dot_general(
        xn.astype(en_ref.dtype), en_ref[...],
        dimension_numbers=(((1,), (1,)), ((), ())),
        preferred_element_type=jnp.float32)                 # (tm, M)

    # half = ||xn - en|| / 2 = sqrt((2 - 2s)/4); clip keeps sqrt/arcsin in
    # range even when the fp dot of unit vectors slightly exceeds +/-1.
    half = jnp.sqrt(jnp.clip((1.0 - s) * 0.5, 0.0, 1.0))
    dists = 2.0 * jnp.square(_arcsin01(half))               # (tm, M)

    rowsum = jnp.sum(dists, axis=1, keepdims=True)          # (tm, 1)

    if n_rows % tm:  # static: mask padded rows of the last partial tile only
        row = i * tm + jax.lax.broadcasted_iota(jnp.int32, (tm, 1), 0)
        rowsum = jnp.where(row < n_rows, rowsum, 0.0)

    o_ref[...] += jnp.sum(rowsum, axis=0, keepdims=True)    # (1, 1) accumulator
    # TODO(synk): `stop` / ReplaceGrad only clamp gradients in backward;
    # forward value is unaffected, so they are intentionally not implemented.


def prompt_forward(x, embed, weight, *, tm=None, mxu_dtype=jnp.float32):
    """abs(weight) * mean(2*arcsin(||xn-en||/2)^2 * sign(weight)) == w * mean."""
    n, d = x.shape
    m, d2 = embed.shape
    assert d == d2
    w = jnp.asarray(weight, dtype=jnp.float32)

    # Hoist embed normalization out of the per-tile loop (computed once).
    en = embed.astype(jnp.float32)
    en = en * jax.lax.rsqrt(
        jnp.maximum(jnp.sum(en * en, axis=1, keepdims=True), 1e-24))
    en = en.astype(mxu_dtype)   # bf16 here = native-rate MXU on v5e/v6e/v7x

    if tm is None:
        tm = n if n <= 256 else 256          # (8,128)-legal, VMEM-safe on v7x
    assert tm == n or tm % 8 == 0, "tile must be full N or a multiple of 8"
    num_tiles = (n + tm - 1) // tm

    # Keep both pipeline buffers of the x tile + the resident embed + the
    # (tm, M) score tile; cap well under v7x's 64 MiB physical VMEM.
    vmem_bytes = 4 * (2 * tm * d + 2 * m * d + 4 * tm * m) + (2 << 20)
    vmem_limit = int(min(max(vmem_bytes, 16 << 20), 32 << 20))

    kernel = functools.partial(_prompt_kernel, n_rows=n, tm=tm)
    total = pl.pallas_call(
        kernel,
        out_shape=jax.ShapeDtypeStruct((1, 1), jnp.float32),
        grid_spec=pltpu.PrefetchScalarGridSpec(
            num_scalar_prefetch=0,
            grid=(num_tiles,),
            in_specs=[
                pl.BlockSpec((tm, d), lambda i: (i, 0)),   # x tile (pipelined)
                pl.BlockSpec((m, d), lambda i: (0, 0)),    # normalized embed
            ],
            out_specs=pl.BlockSpec((1, 1), lambda i: (0, 0)),  # accumulator
        ),
        compiler_params=pltpu.CompilerParams(
            dimension_semantics=("arbitrary",),     # reduction axis
            vmem_limit_bytes=vmem_limit),
    )(x, en)

    # abs(w) * mean(sign(w) * dists) == w * mean(dists)   (exact identity)
    return w * (total[0, 0] / jnp.float32(n * m))


def prompt_ref(x, embed, weight):
    """Pure-JAX reference mirroring the PyTorch forward."""
    eps = 1e-12
    xn = x[:, None, :] / jnp.maximum(
        jnp.linalg.norm(x[:, None, :], axis=2, keepdims=True), eps)
    en = embed[None, :, :] / jnp.maximum(
        jnp.linalg.norm(embed[None, :, :], axis=2, keepdims=True), eps)
    dist = jnp.linalg.norm(xn - en, axis=2)
    dists = 2.0 * jnp.square(jnp.arcsin(dist / 2.0)) * jnp.sign(weight)
    return jnp.abs(weight) * jnp.mean(dists)


if __name__ == "__main__":
    key = jax.random.PRNGKey(0)
    kx, ke, kx2 = jax.random.split(key, 3)

    # Test 1: small single-tile path (N cutouts vs M prompt embeddings).
    N, M, D = 8, 4, 128
    x = jax.random.normal(kx, (N, D), dtype=jnp.float32)
    embed = jax.random.normal(ke, (M, D), dtype=jnp.float32)
    out = prompt_forward(x, embed, 1.0)
    jax.block_until_ready(out)
    ref = prompt_ref(x, embed, jnp.float32(1.0))
    assert jnp.allclose(out, ref, atol=1e-5, rtol=1e-5), (float(out), float(ref))

    # Test 2: multi-tile grid with a padded (masked) last tile, negative weight.
    N2 = 40
    x2 = jax.random.normal(kx2, (N2, D), dtype=jnp.float32)
    out2 = prompt_forward(x2, embed, -0.5, tm=16)
    jax.block_until_ready(out2)
    ref2 = prompt_ref(x2, embed, jnp.float32(-0.5))
    assert jnp.allclose(out2, ref2, atol=1e-5, rtol=1e-5), (float(out2), float(ref2))

    # Test 3: bf16 MXU operands (f32 accumulate + f32 epilogue), loose tolerance.
    out3 = prompt_forward(x2, embed, 1.0, tm=16, mxu_dtype=jnp.bfloat16)
    jax.block_until_ready(out3)
    ref3 = prompt_ref(x2, embed, jnp.float32(1.0))
    assert jnp.allclose(out3, ref3, atol=5e-2, rtol=5e-2), (float(out3), float(ref3))

    print("KERNEL_OK")
</pallas_src>

<mosaic_0001>
module attributes {stable_mosaic.version = 11 : i64} {
  func.func @_prompt_kernel(%arg0: i32, %arg1: memref<8x128xf32, #tpu.memory_space<vmem>>, %arg2: memref<4x128xf32, #tpu.memory_space<vmem>>, %arg3: memref<1x1xf32, #tpu.memory_space<vmem>>) attributes {dimension_semantics = [#tpu.dimension_semantics<arbitrary>], iteration_bounds = array<i64: 1>, scalar_prefetch = 0 : i64, scratch_operands = 0 : i64, tpu.core_type = #tpu.core_type<tc>, window_params = [{transform_indices = @transform_0, window_bounds = array<i64: 8, 128>}, {pipeline_mode = #tpu.pipeline_mode<synchronous>, transform_indices = @transform_1, window_bounds = array<i64: 4, 128>}, {pipeline_mode = #tpu.pipeline_mode<synchronous>, transform_indices = @transform_2, window_bounds = array<i64: 1, 1>}]} {
    %c0_i32 = arith.constant 0 : i32
    %0 = arith.cmpi eq, %arg0, %c0_i32 : i32
    %1 = arith.extui %0 : i1 to i32
    %c0_i32_0 = arith.constant 0 : i32
    %2 = arith.cmpi ne, %1, %c0_i32_0 : i32
    scf.if %2 {
      %cst_27 = arith.constant 0.000000e+00 : f32
      %61 = vector.broadcast %cst_27 : f32 to vector<1x1xf32>
      %c0_28 = arith.constant 0 : index
      %c0_29 = arith.constant 0 : index
      %62 = vector.load %arg3[%c0_28, %c0_29] : memref<1x1xf32, #tpu.memory_space<vmem>>, vector<1x1xf32>
      tpu.vector_store %arg3[%c0_28, %c0_29], %61 {strides = array<i32>} : memref<1x1xf32, #tpu.memory_space<vmem>>, vector<1x1xf32>,
    } else {
    }
    %c0 = arith.constant 0 : index
    %c0_1 = arith.constant 0 : index
    %3 = vector.load %arg1[%c0, %c0_1] : memref<8x128xf32, #tpu.memory_space<vmem>>, vector<8x128xf32>
    %4 = arith.mulf %3, %3 : vector<8x128xf32>
    %cst = arith.constant dense<0.000000e+00> : vector<8xf32>
    %5 = vector.multi_reduction <add>, %4, %cst [1] : vector<8x128xf32> to vector<8xf32>
    %6 = vector.shape_cast %5 : vector<8xf32> to vector<8x1xf32>
    %cst_2 = arith.constant 1.000000e-24 : f32
    %7 = vector.broadcast %cst_2 : f32 to vector<8x1xf32>
    %8 = arith.maximumf %6, %7 : vector<8x1xf32>
    %9 = math.rsqrt %8 : vector<8x1xf32>
    %10 = vector.broadcast %9 : vector<8x1xf32> to vector<8x128xf32>
    %11 = arith.mulf %3, %10 : vector<8x128xf32>
    %c0_3 = arith.constant 0 : index
    %c0_4 = arith.constant 0 : index
    %12 = vector.load %arg2[%c0_3, %c0_4] : memref<4x128xf32, #tpu.memory_space<vmem>>, vector<4x128xf32>
    %cst_5 = arith.constant dense<0.000000e+00> : vector<8x4xf32>
    %13 = tpu.matmul %11, %12, %cst_5 {dimension_numbers = #tpu.dot_dimension_numbers<[1], [1], [0], [0], [0, 0, 1, 0], [], []>} : vector<8x128xf32>, vector<4x128xf32>, vector<8x4xf32> -> vector<8x4xf32>
    %cst_6 = arith.constant 1.000000e+00 : f32
    %14 = vector.broadcast %cst_6 : f32 to vector<8x4xf32>
    %15 = arith.subf %14, %13 : vector<8x4xf32>
    %cst_7 = arith.constant 5.000000e-01 : f32
    %16 = vector.broadcast %cst_7 : f32 to vector<8x4xf32>
    %17 = arith.mulf %15, %16 : vector<8x4xf32>
    %cst_8 = arith.constant 0.000000e+00 : f32
    %cst_9 = arith.constant 1.000000e+00 : f32
    %18 = vector.broadcast %cst_8 : f32 to vector<8x4xf32>
    %19 = arith.maximumf %18, %17 : vector<8x4xf32>
    %20 = vector.broadcast %cst_9 : f32 to vector<8x4xf32>
    %21 = arith.minimumf %20, %19 : vector<8x4xf32>
    %22 = math.sqrt %21 : vector<8x4xf32>
    %cst_10 = arith.constant -0.0012624911 : f32
    %23 = vector.broadcast %cst_10 : f32 to vector<8x4xf32>
    %24 = arith.mulf %23, %22 : vector<8x4xf32>
    %cst_11 = arith.constant 6.670090e-03 : f32
    %25 = vector.broadcast %cst_11 : f32 to vector<8x4xf32>
    %26 = arith.addf %24, %25 : vector<8x4xf32>
    %27 = arith.mulf %26, %22 : vector<8x4xf32>
    %cst_12 = arith.constant -0.0170881264 : f32
    %28 = vector.broadcast %cst_12 : f32 to vector<8x4xf32>
    %29 = arith.addf %27, %28 : vector<8x4xf32>
    %30 = arith.mulf %29, %22 : vector<8x4xf32>
    %cst_13 = arith.constant 0.0308918804 : f32
    %31 = vector.broadcast %cst_13 : f32 to vector<8x4xf32>
    %32 = arith.addf %30, %31 : vector<8x4xf32>
    %33 = arith.mulf %32, %22 : vector<8x4xf32>
    %cst_14 = arith.constant -0.0501743034 : f32
    %34 = vector.broadcast %cst_14 : f32 to vector<8x4xf32>
    %35 = arith.addf %33, %34 : vector<8x4xf32>
    %36 = arith.mulf %35, %22 : vector<8x4xf32>
    %cst_15 = arith.constant 0.0889789909 : f32
    %37 = vector.broadcast %cst_15 : f32 to vector<8x4xf32>
    %38 = arith.addf %36, %37 : vector<8x4xf32>
    %39 = arith.mulf %38, %22 : vector<8x4xf32>
    %cst_16 = arith.constant -0.214598805 : f32
    %40 = vector.broadcast %cst_16 : f32 to vector<8x4xf32>
    %41 = arith.addf %39, %40 : vector<8x4xf32>
    %42 = arith.mulf %41, %22 : vector<8x4xf32>
    %cst_17 = arith.constant 1.57079625 : f32
    %43 = vector.broadcast %cst_17 : f32 to vector<8x4xf32>
    %44 = arith.addf %42, %43 : vector<8x4xf32>
    %cst_18 = arith.constant 1.000000e+00 : f32
    %45 = vector.broadcast %cst_18 : f32 to vector<8x4xf32>
    %46 = arith.subf %45, %22 : vector<8x4xf32>
    %47 = math.sqrt %46 : vector<8x4xf32>
    %48 = arith.mulf %47, %44 : vector<8x4xf32>
    %cst_19 = arith.constant 1.57079637 : f32
    %49 = vector.broadcast %cst_19 : f32 to vector<8x4xf32>
    %50 = arith.subf %49, %48 : vector<8x4xf32>
    %51 = arith.mulf %50, %50 : vector<8x4xf32>
    %cst_20 = arith.constant 2.000000e+00 : f32
    %52 = vector.broadcast %cst_20 : f32 to vector<8x4xf32>
    %53 = arith.mulf %52, %51 : vector<8x4xf32>
    %cst_21 = arith.constant dense<0.000000e+00> : vector<8xf32>
    %54 = vector.multi_reduction <add>, %53, %cst_21 [1] : vector<8x4xf32> to vector<8xf32>
    %55 = vector.shape_cast %54 : vector<8xf32> to vector<8x1xf32>
    %c0_22 = arith.constant 0 : index
    %c0_23 = arith.constant 0 : index
    %56 = vector.load %arg3[%c0_22, %c0_23] : memref<1x1xf32, #tpu.memory_space<vmem>>, vector<1x1xf32>
    %cst_24 = arith.constant dense<0.000000e+00> : vector<1xf32>
    %57 = vector.multi_reduction <add>, %55, %cst_24 [0] : vector<8x1xf32> to vector<1xf32>
    %58 = vector.shape_cast %57 : vector<1xf32> to vector<1x1xf32>
    %59 = arith.addf %56, %58 : vector<1x1xf32>
    %c0_25 = arith.constant 0 : index
    %c0_26 = arith.constant 0 : index
    %60 = vector.load %arg3[%c0_25, %c0_26] : memref<1x1xf32, #tpu.memory_space<vmem>>, vector<1x1xf32>
    tpu.vector_store %arg3[%c0_25, %c0_26], %59 {strides = array<i32>} : memref<1x1xf32, #tpu.memory_space<vmem>>, vector<1x1xf32>,
    return
  }
  func.func @transform_0(%arg0: i32) -> (i32, i32) {
    %c0_i32 = arith.constant 0 : i32
    %c0_i32_0 = arith.constant 0 : i32
    return %arg0, %c0_i32 : i32, i32
  }
  func.func @transform_1(%arg0: i32) -> (i32, i32) {
    %c0_i32 = arith.constant 0 : i32
    %c0_i32_0 = arith.constant 0 : i32
    %c0_i32_1 = arith.constant 0 : i32
    return %c0_i32, %c0_i32_0 : i32, i32
  }
  func.func @transform_2(%arg0: i32) -> (i32, i32) {
    %c0_i32 = arith.constant 0 : i32
    %c0_i32_0 = arith.constant 0 : i32
    %c0_i32_1 = arith.constant 0 : i32
    return %c0_i32, %c0_i32_0 : i32, i32
  }
}

</mosaic_0001>

<llo_original>
// kernel: tpu_custom_call.1
$region0: #{tpu_custom_call.1}
  #allocation0 [shape = 'u32[]', space=smem, size = 0x4, offset = 0x4, fixed_abs, tag = 'smem constant byte address 0x4 - core index']
  #allocation1 [shape = 'u32[144,128]{1,0:T(1,128)}', space=vmem, size = 0x12000, scoped, tag = 'internal scratch']
  %s0 = inlined_call_operand.hbm [shape: f32[8,128], index: 0, kind: input, shape index: {}]
  %s1 = inlined_call_operand.hbm [shape: f32[4,128], index: 1, kind: input, shape index: {}]
  %s2 = inlined_call_operand.hbm [shape: f32[1,1], index: 2, kind: output, shape index: {}]
  %s3 = sld [smem:[#allocation0]]
  $region30: #{tpu_custom_call.1} parent=0
    _
  %s5 = ssub.s32 1, %s3
  %s6 = scalar_select 0, %s5, %s3
  $region1: #{tpu_custom_call.1} parent=0
    #allocation2 [shape = 'u8[4096]{0}', space=vmem, size = 0x1000, scoped, tag = 'input window, operand 0, single buffered']
    #allocation3 [shape = 's32[1]{0}', space=sflag, size = 0x4, scoped, tag = 'scoped memory for tpu_custom_call.1']
    #allocation4 [shape = 's32[1]{0}', space=sflag, size = 0x4, scoped, tag = 'scoped memory for tpu_custom_call.1']
    #allocation5 [shape = 'u8[2048]{0}', space=vmem, size = 0x800, scoped, tag = 'input window, operand 1, single buffered']
    #allocation6 [shape = 's32[1]{0}', space=sflag, size = 0x4, scoped, tag = 'scoped memory for tpu_custom_call.1']
    #allocation7 [shape = 'u8[512]{0}', space=vmem, size = 0x400, scoped, tag = 'output window, operand 0, single buffered']
    %7 = vsyncpa [#allocation3], 0
    %8 = vsyncpa [#allocation6], 0
    %9 = vsyncpa [#allocation4], 0
    // Predicated region
    $region2: #{tpu_custom_call.1} parent=1 // pred_check
      _
    $region3: #{tpu_custom_call.1} parent=1 // pred_check_branch
      %11 = sbr.rel (0) target = $region5
    $region4: #{tpu_custom_call.1} parent=1 // pred_region
      %s13 = ssub.s32 128, 128
      %14 = vsyncadd [#allocation3], %s13
      %s16 = sshll.u32 [#allocation2], 4
      %s17 = int_to_ptr.vmem [resolvable:$true] %s16
      %19 = dma.hbm_to_vmem [thread:$0]  %s0, 128, %s17, [#allocation3]
    $region5: #{tpu_custom_call.1} parent=1 // pred_fallthru
      _
    // Predicated region
    $region6: #{tpu_custom_call.1} parent=1 // pred_check
      _
    $region7: #{tpu_custom_call.1} parent=1 // pred_check_branch
      %21 = sbr.rel (0) target = $region9
    $region8: #{tpu_custom_call.1} parent=1 // pred_region
      %s23 = ssub.s32 64, 64
      %24 = vsyncadd [#allocation6], %s23
      %s26 = sshll.u32 [#allocation5], 4
      %s27 = int_to_ptr.vmem [resolvable:$true] %s26
      %29 = dma.hbm_to_vmem [thread:$0]  %s1, 64, %s27, [#allocation6]
    $region9: #{tpu_custom_call.1} parent=1 // pred_fallthru
      _
    // Predicated region
    $region10: #{tpu_custom_call.1} parent=1 // pred_check
      _
    $region11: #{tpu_custom_call.1} parent=1 // pred_check_branch
      %31 = sbr.rel (0) target = $region13
    $region12: #{tpu_custom_call.1} parent=1 // pred_region
      %32 = dma.done [#allocation3], 128
    $region13: #{tpu_custom_call.1} parent=1 // pred_fallthru
      _
    // Predicated region
    $region14: #{tpu_custom_call.1} parent=1 // pred_check
      _
    $region15: #{tpu_custom_call.1} parent=1 // pred_check_branch
      %34 = sbr.rel (0) target = $region17
    $region16: #{tpu_custom_call.1} parent=1 // pred_region
      %35 = dma.done [#allocation6], 64
    $region17: #{tpu_custom_call.1} parent=1 // pred_fallthru
      _
    %p36 = scmp.eq.s32.totalorder 0, 0
    // Predicated region
    $region18: #{tpu_custom_call.1} parent=1 // pred_check
      %p37 = pneg %p36
    $region19: #{tpu_custom_call.1} parent=1 // pred_check_branch
      %39 = sbr.rel (%p37) target = $region21
    $region20: #{tpu_custom_call.1} parent=1 // pred_region
      %vm40 = vcmask 0
      %41 = vst.msk [vmem:[#allocation7] sm:$0x1] %vm40, 0.0
    $region21: #{tpu_custom_call.1} parent=1 // pred_fallthru
      _
    %v42 = vld [vmem:[#allocation2] sm:$0xff]
    %v43 = vmul.f32 %v42, %v42
    %44 = vadd.xlane.f32.xlu0 %v43
    %v45 = vpop.xlane.xlu0 %44
    %v46 = vmax.f32 %v45, 1e-24
    %v47 = vrsqrt.pop %v46
    %v48 = vmul.f32 %v42, %v47
    %v49 = vld [vmem:[#allocation5] sm:$0xf]
    %50 = vmatprep.subr.mxu0 0.0
    %51 = vmatpush1.xpose.msra.mxu0 %v49
    %52 = vmatprep.subr.mxu0 0.0
    %53 = vmatpush1.xpose.msra.mxu0 0.0
    %54 = vmatprep.subr.mxu0 0.0
    %55 = vmatpush1.xpose.msra.mxu0 0.0
    %56 = vmatprep.subr.mxu0 0.0
    %57 = vmatpush1.xpose.msra.mxu0 0.0
    %58 = vmatprep.subr.mxu0 0.0
    %59 = vmatpush1.xpose.msra.mxu0 0.0
    %60 = vmatprep.subr.mxu0 0.0
    %61 = vmatpush1.xpose.msra.mxu0 0.0
    %62 = vmatprep.subr.mxu0 0.0
    %63 = vmatpush1.xpose.msra.mxu0 0.0
    %64 = vmatprep.subr.mxu0 0.0
    %65 = vmatpush1.xpose.msra.mxu0 0.0
    %66 = vmatprep.subr.mxu0 0.0
    %67 = vmatpush1.xpose.msra.mxu0 0.0
    %68 = vmatprep.subr.mxu0 0.0
    %69 = vmatpush1.xpose.msra.mxu0 0.0
    %70 = vmatprep.subr.mxu0 0.0
    %71 = vmatpush1.xpose.msra.mxu0 0.0
    %72 = vmatprep.subr.mxu0 0.0
    %73 = vmatpush1.xpose.msra.mxu0 0.0
    %74 = vmatprep.subr.mxu0 0.0
    %75 = vmatpush1.xpose.msra.mxu0 0.0
    %76 = vmatprep.subr.mxu0 0.0
    %77 = vmatpush1.xpose.msra.mxu0 0.0
    %78 = vmatprep.subr.mxu0 0.0
    %79 = vmatpush1.xpose.msra.mxu0 0.0
    %80 = vmatprep.subr.mxu0 0.0
    %81 = vmatpush1.xpose.msra.mxu0 0.0
    %82 = vmatprep.subr.mxu0 0.0
    %83 = vmatpush1.xpose.msra.mxu0 0.0
    %84 = vmatprep.subr.mxu0 0.0
    %85 = vmatpush1.xpose.msra.mxu0 0.0
    %86 = vmatprep.subr.mxu0 0.0
    %87 = vmatpush1.xpose.msra.mxu0 0.0
    %88 = vmatprep.subr.mxu0 0.0
    %89 = vmatpush1.xpose.msra.mxu0 0.0
    %90 = vmatprep.subr.mxu0 0.0
    %91 = vmatpush1.xpose.msra.mxu0 0.0
    %92 = vmatprep.subr.mxu0 0.0
    %93 = vmatpush1.xpose.msra.mxu0 0.0
    %94 = vmatprep.subr.mxu0 0.0
    %95 = vmatpush1.xpose.msra.mxu0 0.0
    %96 = vmatprep.subr.mxu0 0.0
    %97 = vmatpush1.xpose.msra.mxu0 0.0
    %98 = vmatprep.subr.mxu0 0.0
    %99 = vmatpush1.xpose.msra.mxu0 0.0
    %100 = vmatprep.subr.mxu0 0.0
    %101 = vmatpush1.xpose.msra.mxu0 0.0
    %102 = vmatprep.subr.mxu0 0.0
    %103 = vmatpush1.xpose.msra.mxu0 0.0
    %104 = vmatprep.subr.mxu0 0.0
    %105 = vmatpush1.xpose.msra.mxu0 0.0
    %106 = vmatprep.subr.mxu0 0.0
    %107 = vmatpush1.xpose.msra.mxu0 0.0
    %108 = vmatprep.subr.mxu0 0.0
    %109 = vmatpush1.xpose.msra.mxu0 0.0
    %110 = vmatprep.subr.mxu0 0.0
    %111 = vmatpush1.xpose.msra.mxu0 0.0
    %112 = vmatprep.subr.mxu0 0.0
    %113 = vmatpush1.xpose.msra.mxu0 0.0
    %114 = vmatprep.mubr.f32.mxu0 0.0
    %115 = vmatmul.mubr.f32.gmra.mrb[0].mxu0 %v48
    %v116 = vpop.f32.mrb[0].mxu0
    %v117 = vadd.f32 0.0, %v116
    %v118 = vpop.f32.mrb[0].mxu0
    %119 = vdwg.mxu0
    %v120 = vsub.f32 1.0, %v117
    %v121 = vmul.f32 %v120, 0.5
    %v122 = vmax.f32 %v121, 0.0
    %v123 = vmin.f32 %v122, 1.0
    %v124 = vrsqrt.pop %v123
    %v125 = vmul.f32 %v123, %v124
    %vm126 = vcmp.eq.f32.partialorder %v123, inf
    %v127 = vsel %vm126, %v123, %v125
    %vm128 = vcmp.eq.f32.partialorder %v123, 0.0
    %v129 = vand.u32 %v123, 2147483648
    %v130 = vsel %vm128, %v129, %v127
    %v131 = vmul.f32 %v130, -0.0012624911
    %v132 = vadd.f32 %v131, 0.00667009
    %v133 = vmul.f32 %v132, %v130
    %v134 = vadd.f32 %v133, -0.017088126
    %v135 = vmul.f32 %v134, %v130
    %v136 = vadd.f32 %v135, 0.03089188
    %v137 = vmul.f32 %v136, %v130
    %v138 = vadd.f32 %v137, -0.050174303
    %v139 = vmul.f32 %v138, %v130
    %v140 = vadd.f32 %v139, 0.08897899
    %v141 = vmul.f32 %v140, %v130
    %v142 = vadd.f32 %v141, -0.2145988
    %v143 = vmul.f32 %v142, %v130
    %v144 = vadd.f32 %v143, 1.5707963
    %v145 = vsub.f32 1.0, %v130
    %v146 = vrsqrt.pop %v145
    %v147 = vmul.f32 %v145, %v146
    %vm148 = vcmp.eq.f32.partialorder %v145, inf
    %v149 = vsel %vm148, %v145, %v147
    %vm150 = vcmp.eq.f32.partialorder %v145, 0.0
    %v151 = vand.u32 %v145, 2147483648
    %v152 = vsel %vm150, %v151, %v149
    %v153 = vmul.f32 %v152, %v144
    %v154 = vsub.f32 1.5707964, %v153
    %v155 = vmul.f32 %v154, %v154
    %v156 = vmul.f32 %v155, 2.0
    %vm157 = vcmask 31744
    %v158 = vsel %vm157, %v156, 0.0
    %159 = vadd.xlane.f32.xlu0 %v158
    %v160 = vpop.xlane.xlu0 %159
    %v161 = vld [vmem:[#allocation7] sm:$0x1]
    %v162 = vrot.slane %v160, 4
    %v163 = vadd.f32 %v160, %v162
    %v164 = vrot.slane %v163, 2
    %v165 = vadd.f32 %v163, %v164
    %v166 = vrot.slane %v165, 1
    %v167 = vadd.f32 %v165, %v166
    %v168 = vadd.f32 %v161, %v167
    %vm169 = vcmask 0
    %170 = vst.msk [vmem:[#allocation7] sm:$0x1] %vm169, %v168
    // Predicated region
    $region22: #{tpu_custom_call.1} parent=1 // pred_check
      _
    $region23: #{tpu_custom_call.1} parent=1 // pred_check_branch
      %172 = sbr.rel (0) target = $region25
    $region24: #{tpu_custom_call.1} parent=1 // pred_region
      %s174 = ssub.s32 16, 16
      %175 = vsyncadd [#allocation4], %s174
      %s177 = sshll.u32 [#allocation7], 4
      %s178 = int_to_ptr.vmem [resolvable:$true] %s177
      %180 = dma.vmem_to_hbm [thread:$0]  %s178, 16, %s2, [#allocation4]
    $region25: #{tpu_custom_call.1} parent=1 // pred_fallthru
      _
    // Predicated region
    $region26: #{tpu_custom_call.1} parent=1 // pred_check
      _
    $region27: #{tpu_custom_call.1} parent=1 // pred_check_branch
      %182 = sbr.rel (0) target = $region29
    $region28: #{tpu_custom_call.1} parent=1 // pred_region
      %183 = dma.done [#allocation4], 16
    $region29: #{tpu_custom_call.1} parent=1 // pred_fallthru
      _
    %184 = vsyncpa [#allocation3], 1
    %185 = vsyncpa [#allocation6], 1
    %186 = vsyncpa [#allocation4], 1

</llo_original>
